<compile_context>
chip_gen: v7x
topology: tpu7x:2x2x1
jax: 0.10.0
libtpu: 0.0.40
codegen_flags: <defaults>
</compile_context>

<pallas_src>
import jax
import jax.numpy as jnp
from jax.experimental import pallas as pl
from jax.experimental.pallas import tpu as pltpu

input_size = 10
hidden_size = 64
output_size = 1


def mlp_kernel(x_ref, w1_ref, b1_ref, w2_ref, b2_ref, o_ref):
    # Layer 1 on the MXU: (hid, in) @ (in, tb) -> (hid, tb), f32 accumulation.
    h = jnp.dot(w1_ref[...], x_ref[...], preferred_element_type=jnp.float32)
    # Bias (lane-broadcast of the (hid, 1) column) + ReLU on the VPU.
    h = jnp.maximum(h + b1_ref[...], 0.0)
    # Layer 2 on the MXU: (out, hid) @ (hid, tb) -> (out, tb); lane-dense store.
    y = jnp.dot(w2_ref[...], h, preferred_element_type=jnp.float32)
    o_ref[...] = (y + b2_ref[...]).astype(o_ref.dtype)


def two_layer_mlp(x, w1, b1, w2, b2, *, tb=None):
    """relu(x @ w1.T + b1) @ w2.T + b2   (torch nn.Linear semantics).

    x : (B, input_size)        float32
    w1: (hidden, input_size)   torch layer1.weight layout
    b1: (hidden,)
    w2: (output, hidden)       torch layer2.weight layout
    b2: (output,)
    returns (B, output)
    """
    B, in_f = x.shape
    hid = w1.shape[0]
    out_f = w2.shape[0]

    # Batch tile (lane axis), multiple of 128. Default ~B/2 so there are >=2
    # grid steps for v7x's two TCs; capped at 4096 (VMEM is nowhere near a
    # limit at these feature sizes on any generation).
    if tb is None:
        tb = 128 * pl.cdiv(pl.cdiv(B, 2), 128)
    tb = int(min(max(tb, 128), 4096, 128 * pl.cdiv(B, 128)))
    grid = pl.cdiv(B, tb)

    # Feature-major activations: batch on the 128-lane axis end-to-end.
    # (Ideally the producer emits x feature-major already; this is a one-off
    # relayout of the only B-scaling operand, replacing the old pad pass.)
    x_t = x.T                      # (in_f, B)
    b1c = b1[:, None]              # (hid, 1)
    b2c = b2[:, None]              # (out_f, 1)

    out_t = pl.pallas_call(
        mlp_kernel,
        out_shape=jax.ShapeDtypeStruct((out_f, B), x.dtype),
        grid_spec=pltpu.PrefetchScalarGridSpec(
            num_scalar_prefetch=0,
            grid=(grid,),
            in_specs=[
                pl.BlockSpec((in_f, tb), lambda i: (0, i)),    # x_t: batch-tiled
                pl.BlockSpec((hid, in_f), lambda i: (0, 0)),   # w1: pinned
                pl.BlockSpec((hid, 1), lambda i: (0, 0)),      # b1: pinned
                pl.BlockSpec((out_f, hid), lambda i: (0, 0)),  # w2: pinned
                pl.BlockSpec((out_f, 1), lambda i: (0, 0)),    # b2: pinned
            ],
            out_specs=pl.BlockSpec((out_f, tb), lambda i: (0, i)),
        ),
        compiler_params=pltpu.CompilerParams(
            dimension_semantics=("parallel",)),
    )(x_t, w1, b1c, w2, b2c)

    # (out_f, B) -> (B, out_f); free relayout for out_f == 1.
    return out_t.T


def init_params(key, in_f, hid_f, out_f, dtype=jnp.float32):
    # PyTorch nn.Linear default init: U(-1/sqrt(fan_in), 1/sqrt(fan_in)),
    # weights kept in the torch (out_features, in_features) layout.
    k1, k2, k3, k4 = jax.random.split(key, 4)
    bound1 = 1.0 / jnp.sqrt(in_f)
    bound2 = 1.0 / jnp.sqrt(hid_f)
    w1 = jax.random.uniform(k1, (hid_f, in_f), dtype, -bound1, bound1)
    b1 = jax.random.uniform(k2, (hid_f,), dtype, -bound1, bound1)
    w2 = jax.random.uniform(k3, (out_f, hid_f), dtype, -bound2, bound2)
    b2 = jax.random.uniform(k4, (out_f,), dtype, -bound2, bound2)
    return w1, b1, w2, b2


def reference(x, w1, b1, w2, b2):
    h = jnp.maximum(
        jnp.dot(x, w1.T, precision=jax.lax.Precision.HIGHEST) + b1, 0.0)
    return jnp.dot(h, w2.T, precision=jax.lax.Precision.HIGHEST) + b2


if __name__ == "__main__":
    key = jax.random.PRNGKey(0)
    kx, kp = jax.random.split(key)

    batch = 200  # small; 2 batch tiles of 128, second one ragged (masked store)
    x = jax.random.normal(kx, (batch, input_size), jnp.float32)
    w1, b1, w2, b2 = init_params(kp, input_size, hidden_size, output_size)

    y = two_layer_mlp(x, w1, b1, w2, b2)
    y = jax.block_until_ready(y)

    y_ref = reference(x, w1, b1, w2, b2)
    assert y.shape == (batch, output_size), y.shape
    # Tolerance covers possible bf16-pass MXU behaviour for f32 matmuls while
    # still catching any layout / bias / masking bug (those are O(0.1-1)).
    assert jnp.allclose(y, y_ref, atol=2e-2, rtol=2e-2), \
        float(jnp.max(jnp.abs(y - y_ref)))

    print("KERNEL_OK")
</pallas_src>

<mosaic_0001>
module attributes {stable_mosaic.version = 11 : i64} {
  func.func @mlp_kernel(%arg0: i32, %arg1: memref<10x128xf32, #tpu.memory_space<vmem>>, %arg2: memref<64x10xf32, #tpu.memory_space<vmem>>, %arg3: memref<64x1xf32, #tpu.memory_space<vmem>>, %arg4: memref<1x64xf32, #tpu.memory_space<vmem>>, %arg5: memref<1x1xf32, #tpu.memory_space<vmem>>, %arg6: memref<1x128xf32, #tpu.memory_space<vmem>>) attributes {dimension_semantics = [#tpu.dimension_semantics<parallel>], iteration_bounds = array<i64: 2>, scalar_prefetch = 0 : i64, scratch_operands = 0 : i64, tpu.core_type = #tpu.core_type<tc>, window_params = [{transform_indices = @transform_0, window_bounds = array<i64: 10, 128>}, {pipeline_mode = #tpu.pipeline_mode<synchronous>, transform_indices = @transform_1, window_bounds = array<i64: 64, 10>}, {pipeline_mode = #tpu.pipeline_mode<synchronous>, transform_indices = @transform_2, window_bounds = array<i64: 64, 1>}, {pipeline_mode = #tpu.pipeline_mode<synchronous>, transform_indices = @transform_3, window_bounds = array<i64: 1, 64>}, {pipeline_mode = #tpu.pipeline_mode<synchronous>, transform_indices = @transform_4, window_bounds = array<i64: 1, 1>}, {transform_indices = @transform_5, window_bounds = array<i64: 1, 128>}]} {
    %c0 = arith.constant 0 : index
    %c0_0 = arith.constant 0 : index
    %0 = vector.load %arg2[%c0, %c0_0] : memref<64x10xf32, #tpu.memory_space<vmem>>, vector<64x10xf32>
    %c0_1 = arith.constant 0 : index
    %c0_2 = arith.constant 0 : index
    %1 = vector.load %arg1[%c0_1, %c0_2] : memref<10x128xf32, #tpu.memory_space<vmem>>, vector<10x128xf32>
    %cst = arith.constant dense<0.000000e+00> : vector<64x128xf32>
    %2 = tpu.matmul %0, %1, %cst {dimension_numbers = #tpu.dot_dimension_numbers<[1], [0], [0], [1], [0, 0, 1, 1], [], []>} : vector<64x10xf32>, vector<10x128xf32>, vector<64x128xf32> -> vector<64x128xf32>
    %c0_3 = arith.constant 0 : index
    %c0_4 = arith.constant 0 : index
    %3 = vector.load %arg3[%c0_3, %c0_4] : memref<64x1xf32, #tpu.memory_space<vmem>>, vector<64x1xf32>
    %4 = vector.broadcast %3 : vector<64x1xf32> to vector<64x128xf32>
    %5 = arith.addf %2, %4 : vector<64x128xf32>
    %cst_5 = arith.constant 0.000000e+00 : f32
    %6 = vector.broadcast %cst_5 : f32 to vector<64x128xf32>
    %7 = arith.maximumf %5, %6 : vector<64x128xf32>
    %c0_6 = arith.constant 0 : index
    %c0_7 = arith.constant 0 : index
    %8 = vector.load %arg4[%c0_6, %c0_7] : memref<1x64xf32, #tpu.memory_space<vmem>>, vector<1x64xf32>
    %cst_8 = arith.constant dense<0.000000e+00> : vector<1x128xf32>
    %9 = tpu.matmul %8, %7, %cst_8 {dimension_numbers = #tpu.dot_dimension_numbers<[1], [0], [0], [1], [0, 0, 1, 1], [], []>} : vector<1x64xf32>, vector<64x128xf32>, vector<1x128xf32> -> vector<1x128xf32>
    %c0_9 = arith.constant 0 : index
    %c0_10 = arith.constant 0 : index
    %10 = vector.load %arg5[%c0_9, %c0_10] : memref<1x1xf32, #tpu.memory_space<vmem>>, vector<1x1xf32>
    %11 = vector.broadcast %10 : vector<1x1xf32> to vector<1x128xf32>
    %12 = arith.addf %9, %11 : vector<1x128xf32>
    %c0_11 = arith.constant 0 : index
    %c0_12 = arith.constant 0 : index
    %13 = vector.load %arg6[%c0_11, %c0_12] : memref<1x128xf32, #tpu.memory_space<vmem>>, vector<1x128xf32>
    tpu.vector_store %arg6[%c0_11, %c0_12], %12 {strides = array<i32>} : memref<1x128xf32, #tpu.memory_space<vmem>>, vector<1x128xf32>,
    return
  }
  func.func @transform_0(%arg0: i32) -> (i32, i32) {
    %c0_i32 = arith.constant 0 : i32
    %c0_i32_0 = arith.constant 0 : i32
    return %c0_i32, %arg0 : i32, i32
  }
  func.func @transform_1(%arg0: i32) -> (i32, i32) {
    %c0_i32 = arith.constant 0 : i32
    %c0_i32_0 = arith.constant 0 : i32
    %c0_i32_1 = arith.constant 0 : i32
    return %c0_i32, %c0_i32_0 : i32, i32
  }
  func.func @transform_2(%arg0: i32) -> (i32, i32) {
    %c0_i32 = arith.constant 0 : i32
    %c0_i32_0 = arith.constant 0 : i32
    %c0_i32_1 = arith.constant 0 : i32
    return %c0_i32, %c0_i32_0 : i32, i32
  }
  func.func @transform_3(%arg0: i32) -> (i32, i32) {
    %c0_i32 = arith.constant 0 : i32
    %c0_i32_0 = arith.constant 0 : i32
    %c0_i32_1 = arith.constant 0 : i32
    return %c0_i32, %c0_i32_0 : i32, i32
  }
  func.func @transform_4(%arg0: i32) -> (i32, i32) {
    %c0_i32 = arith.constant 0 : i32
    %c0_i32_0 = arith.constant 0 : i32
    %c0_i32_1 = arith.constant 0 : i32
    return %c0_i32, %c0_i32_0 : i32, i32
  }
  func.func @transform_5(%arg0: i32) -> (i32, i32) {
    %c0_i32 = arith.constant 0 : i32
    %c0_i32_0 = arith.constant 0 : i32
    return %c0_i32, %arg0 : i32, i32
  }
}

</mosaic_0001>

<llo_original>
// kernel: tpu_custom_call.1
$region0: #{tpu_custom_call.1}
  #allocation0 [shape = 'u32[]', space=smem, size = 0x4, offset = 0x4, fixed_abs, tag = 'smem constant byte address 0x4 - core index']
  #allocation1 [shape = 'u32[144,128]{1,0:T(1,128)}', space=vmem, size = 0x12000, scoped, tag = 'internal scratch']
  #allocation2 [shape = 'f32[1,1]{1,0:T(1,128)S(1)}', space=vmem, size = 0x200, scoped, tag = 'scoped memory for tpu_custom_call.1']
  %s0 = inlined_call_operand.vmem [shape: f32[10,200], index: 0, kind: input, shape index: {}]
  %s1 = inlined_call_operand.vmem [shape: f32[64,10], index: 1, kind: input, shape index: {}]
  %s2 = inlined_call_operand.vmem [shape: f32[64,1], index: 2, kind: input, shape index: {}]
  %s3 = inlined_call_operand.vmem [shape: f32[1,64], index: 3, kind: input, shape index: {}]
  %s4 = inlined_call_operand.<no memory space> [shape: f32[1,1], index: 4, kind: input, shape index: {}]
  %s5 = inlined_call_operand.hbm [shape: f32[1,200], index: 5, kind: output, shape index: {}]
  %s6 = sld [smem:[#allocation0]]
  $region91: #{tpu_custom_call.1} parent=0
    _
  %s8 = ssub.s32 1, %s6
  %s9 = scalar_select 0, %s8, %s6
  %v10 = vstv %s4
  %11 = vst [vmem:[#allocation2] sm:$0x1] %v10
  $region1: #{tpu_custom_call.1} parent=0
    #allocation3 [shape = 'u8[16384]{0}', space=vmem, size = 0x4000, scoped, tag = 'input window, operand 0']
    #allocation4 [shape = 'u8[1024]{0}', space=vmem, size = 0x400, scoped, tag = 'output window, operand 0']
    #allocation5 [shape = 's32[2]{0}', space=sflag, size = 0x8, scoped, tag = 'scoped memory for tpu_custom_call.1']
    %12 = vsyncpa [#allocation5], 0
    %s13 = scalar_lea.sflag [#allocation5], 1
    %14 = vsyncpa %s13, 0
    loop: start=0, step=1, limit=4
    $region2: #{tpu_custom_call.1} parent=1 // loop_pre_header
      _
    $region3: #{tpu_custom_call.1} parent=1 // loop_header
      %s16 = sphi 0, %s20
      %p17 = scmp.ge.s32.totalorder %s16, 4
      %s26 = sphi 0, %s28
      %s29 = sphi 0, %s26
      %s30 = sphi 0, %s29
      %s46 = sphi 0, %s30
      %s50 = sphi 0, %s50
      %s52 = sphi 0, %s50
      %s53 = sphi 0, %s52
      %s67 = sphi 0, %s53
      %s71 = sphi 0, %s71
      %s73 = sphi 0, %s71
      %s74 = sphi 0, %s73
      %s88 = sphi 0, %s74
      %s92 = sphi 0, %s92
      %s94 = sphi 0, %s92
      %s95 = sphi 0, %s94
      %s109 = sphi 0, %s95
      %s113 = sphi 0, %s113
      %s115 = sphi 0, %s113
      %s116 = sphi 0, %s115
      %s130 = sphi 0, %s116
      %s136 = sphi 0, %s138
      %s139 = sphi 0, %s136
      %s140 = sphi 0, %s139
      %s156 = sphi 0, %s140
    $region4: #{tpu_custom_call.1} parent=1 // loop_header_branch
      %19 = sbr.rel (%p17) target = $region8
    $region5: #{tpu_custom_call.1} parent=1 // loop_body
      %s21 = ssub.s32 %s16, 1
      %s22 = ssub.s32 %s16, 2
      %s23 = sadd.s32 %s16, 1
      %s24 = ssub.s32 %s16, %s23
      %p25 = scmp.eq.s32.totalorder %s24, 0
      %s27 = sadd.s32 %s26, 1
      %s28 = scalar_select %p25, %s26, %s27
      %p31 = pneg %p25
      %p32 = scmp.eq.s32.totalorder %s16, 1
      %p33 = por %p31, %p32
      %p34 = scmp.ne.s32.totalorder %s26, %s29
      %p35 = scmp.eq.s32.totalorder %s16, 0
      %p36 = por %p34, %p35
      %p37 = scmp.ne.s32.totalorder %s26, %s29
      %p38 = scmp.eq.s32.totalorder %s21, 1
      %p39 = por %p37, %p38
      %p40 = scmp.ne.s32.totalorder %s29, %s30
      %p41 = scmp.eq.s32.totalorder %s21, 0
      %p42 = por %p40, %p41
      %p43 = scmp.ne.s32.totalorder %s29, %s30
      %p44 = scmp.eq.s32.totalorder %s22, 1
      %p45 = por %p43, %p44
      %p47 = scmp.ne.s32.totalorder %s30, %s46
      %p48 = scmp.eq.s32.totalorder %s22, 0
      %p49 = por %p47, %p48
      %s51 = sadd.s32 %s50, 1
      %p54 = scmp.eq.s32.totalorder %s16, 1
      %p55 = scmp.ne.s32.totalorder %s50, %s52
      %p56 = scmp.eq.s32.totalorder %s16, 0
      %p57 = por %p55, %p56
      %p58 = scmp.ne.s32.totalorder %s50, %s52
      %p59 = scmp.eq.s32.totalorder %s21, 1
      %p60 = por %p58, %p59
      %p61 = scmp.ne.s32.totalorder %s52, %s53
      %p62 = scmp.eq.s32.totalorder %s21, 0
      %p63 = por %p61, %p62
      %p64 = scmp.ne.s32.totalorder %s52, %s53
      %p65 = scmp.eq.s32.totalorder %s22, 1
      %p66 = por %p64, %p65
      %p68 = scmp.ne.s32.totalorder %s53, %s67
      %p69 = scmp.eq.s32.totalorder %s22, 0
      %p70 = por %p68, %p69
      %s72 = sadd.s32 %s71, 1
      %p75 = scmp.eq.s32.totalorder %s16, 1
      %p76 = scmp.ne.s32.totalorder %s71, %s73
      %p77 = scmp.eq.s32.totalorder %s16, 0
      %p78 = por %p76, %p77
      %p79 = scmp.ne.s32.totalorder %s71, %s73
      %p80 = scmp.eq.s32.totalorder %s21, 1
      %p81 = por %p79, %p80
      %p82 = scmp.ne.s32.totalorder %s73, %s74
      %p83 = scmp.eq.s32.totalorder %s21, 0
      %p84 = por %p82, %p83
      %p85 = scmp.ne.s32.totalorder %s73, %s74
      %p86 = scmp.eq.s32.totalorder %s22, 1
      %p87 = por %p85, %p86
      %p89 = scmp.ne.s32.totalorder %s74, %s88
      %p90 = scmp.eq.s32.totalorder %s22, 0
      %p91 = por %p89, %p90
      %s93 = sadd.s32 %s92, 1
      %p96 = scmp.eq.s32.totalorder %s16, 1
      %p97 = scmp.ne.s32.totalorder %s92, %s94
      %p98 = scmp.eq.s32.totalorder %s16, 0
      %p99 = por %p97, %p98
      %p100 = scmp.ne.s32.totalorder %s92, %s94
      %p101 = scmp.eq.s32.totalorder %s21, 1
      %p102 = por %p100, %p101
      %p103 = scmp.ne.s32.totalorder %s94, %s95
      %p104 = scmp.eq.s32.totalorder %s21, 0
      %p105 = por %p103, %p104
      %p106 = scmp.ne.s32.totalorder %s94, %s95
      %p107 = scmp.eq.s32.totalorder %s22, 1
      %p108 = por %p106, %p107
      %p110 = scmp.ne.s32.totalorder %s95, %s109
      %p111 = scmp.eq.s32.totalorder %s22, 0
      %p112 = por %p110, %p111
      %s114 = sadd.s32 %s113, 1
      %p117 = scmp.eq.s32.totalorder %s16, 1
      %p118 = scmp.ne.s32.totalorder %s113, %s115
      %p119 = scmp.eq.s32.totalorder %s16, 0
      %p120 = por %p118, %p119
      %p121 = scmp.ne.s32.totalorder %s113, %s115
      %p122 = scmp.eq.s32.totalorder %s21, 1
      %p123 = por %p121, %p122
      %p124 = scmp.ne.s32.totalorder %s115, %s116
      %p125 = scmp.eq.s32.totalorder %s21, 0
      %p126 = por %p124, %p125
      %p127 = scmp.ne.s32.totalorder %s115, %s116
      %p128 = scmp.eq.s32.totalorder %s22, 1
      %p129 = por %p127, %p128
      %p131 = scmp.ne.s32.totalorder %s116, %s130
      %p132 = scmp.eq.s32.totalorder %s22, 0
      %p133 = por %p131, %p132
      %s134 = ssub.s32 %s16, %s23
      %p135 = scmp.eq.s32.totalorder %s134, 0
      %s137 = sadd.s32 %s136, 1
      %s138 = scalar_select %p135, %s136, %s137
      %p141 = pneg %p135
      %p142 = scmp.eq.s32.totalorder %s16, 1
      %p143 = por %p141, %p142
      %p144 = scmp.ne.s32.totalorder %s136, %s139
      %p145 = scmp.eq.s32.totalorder %s16, 0
      %p146 = por %p144, %p145
      %p147 = scmp.ne.s32.totalorder %s136, %s139
      %p148 = scmp.eq.s32.totalorder %s21, 1
      %p149 = por %p147, %p148
      %p150 = scmp.ne.s32.totalorder %s139, %s140
      %p151 = scmp.eq.s32.totalorder %s21, 0
      %p152 = por %p150, %p151
      %p153 = scmp.ne.s32.totalorder %s139, %s140
      %p154 = scmp.eq.s32.totalorder %s22, 1
      %p155 = por %p153, %p154
      %p157 = scmp.ne.s32.totalorder %s140, %s156
      %p158 = scmp.eq.s32.totalorder %s22, 0
      %p159 = por %p157, %p158
      %p160 = scmp.le.s32.totalorder 1, %s16
      %p161 = scmp.lt.s32.totalorder %s16, 3
      %p162 = pnand %p160, %p161
      %p163 = pneg %p162
      // Predicated region
      $region9: #{tpu_custom_call.1} parent=5 // pred_check
        _
      $region10: #{tpu_custom_call.1} parent=5 // pred_check_branch
        %165 = sbr.rel (%p162) target = $region12
      $region11: #{tpu_custom_call.1} parent=5 // pred_region
        %s166 = ssub.s32 %s16, 1
        // Predicated region
        $region13: #{tpu_custom_call.1} parent=11 // pred_check
          %p167 = pneg %p63
        $region14: #{tpu_custom_call.1} parent=11 // pred_check_branch
          %169 = sbr.rel (%p167) target = $region16
        $region15: #{tpu_custom_call.1} parent=11 // pred_region
          _
        $region16: #{tpu_custom_call.1} parent=11 // pred_fallthru
          _
        // Predicated region
        $region17: #{tpu_custom_call.1} parent=11 // pred_check
          %p170 = pneg %p84
        $region18: #{tpu_custom_call.1} parent=11 // pred_check_branch
          %172 = sbr.rel (%p170) target = $region20
        $region19: #{tpu_custom_call.1} parent=11 // pred_region
          _
        $region20: #{tpu_custom_call.1} parent=11 // pred_fallthru
          _
        // Predicated region
        $region21: #{tpu_custom_call.1} parent=11 // pred_check
          %p173 = pneg %p105
        $region22: #{tpu_custom_call.1} parent=11 // pred_check_branch
          %175 = sbr.rel (%p173) target = $region24
        $region23: #{tpu_custom_call.1} parent=11 // pred_region
          _
        $region24: #{tpu_custom_call.1} parent=11 // pred_fallthru
          _
        // Predicated region
        $region25: #{tpu_custom_call.1} parent=11 // pred_check
          %p176 = pneg %p126
        $region26: #{tpu_custom_call.1} parent=11 // pred_check_branch
          %178 = sbr.rel (%p176) target = $region28
        $region27: #{tpu_custom_call.1} parent=11 // pred_region
          _
        $region28: #{tpu_custom_call.1} parent=11 // pred_fallthru
          _
      $region12: #{tpu_custom_call.1} parent=5 // pred_fallthru
        _
      %p179 = scmp.lt.s32.totalorder %s16, 2
      // Predicated region
      $region29: #{tpu_custom_call.1} parent=5 // pred_check
        %p180 = pneg %p179
      $region30: #{tpu_custom_call.1} parent=5 // pred_check_branch
        %182 = sbr.rel (%p180) target = $region32
      $region31: #{tpu_custom_call.1} parent=5 // pred_region
        // Predicated region
        $region33: #{tpu_custom_call.1} parent=31 // pred_check
          %p183 = pneg %p36
        $region34: #{tpu_custom_call.1} parent=31 // pred_check_branch
          %185 = sbr.rel (%p183) target = $region36
        $region35: #{tpu_custom_call.1} parent=31 // pred_region
          %s186 = sand.u32 %s26, 1
          %s187 = sand.u32 %s26, 1
          %s188 = smul.addr %s187, 16
          %s189 = scalar_lea.vmem [#allocation3], %s188
          %s190 = smul.addr %s16, 8
          %s191 = scalar_lea.vmem %s0, %s190
          // Predicated region
          $region37: #{tpu_custom_call.1} parent=35 // pred_check
            _
          $region38: #{tpu_custom_call.1} parent=35 // pred_check_branch
            %193 = sbr.rel (0) target = $region40
          $region39: #{tpu_custom_call.1} parent=35 // pred_region
            // Predicated region
            $region41: #{tpu_custom_call.1} parent=39 // pred_check
              _
            $region42: #{tpu_custom_call.1} parent=39 // pred_check_branch
              %195 = sbr.rel (0) target = $region44
            $region43: #{tpu_custom_call.1} parent=39 // pred_region
              // Predicated region
              $region56: #{tpu_custom_call.1} parent=43 // pred_check
                _
              $region57: #{tpu_custom_call.1} parent=43 // pred_check_branch
                %212 = sbr.rel (0) target = $region59
              $region58: #{tpu_custom_call.1} parent=43 // pred_region
                loop: start=0, step=1, limit=1
                $region60: #{tpu_custom_call.1} parent=58 // loop_pre_header
                  _
                $region61: #{tpu_custom_call.1} parent=58 // loop_header
                  %s214 = sphi 0, %s218
                  %p215 = scmp.ge.s32.totalorder %s214, 1
                  %s219 = sphi %s191, %s191
                  %s220 = sphi %s189, %s189
                $region62: #{tpu_custom_call.1} parent=58 // loop_header_branch
                  %217 = sbr.rel (%p215) target = $region66
                $region63: #{tpu_custom_call.1} parent=58 // loop_body
                  %v221 = vld [vmem:[%s219] sm:$0xff]
                  %222 = vst [vmem:[%s220] sm:$0xff] %v221
                  %v223 = vld [vmem:[%s219 + $0x10] sm:$0xff]
                  %224 = vst [vmem:[%s220 + $0x8] sm:$0xff] %v223
                $region64: #{tpu_custom_call.1} parent=58 // loop_footer
                  %s218 = sadd.s32 1, %s214
                $region65: #{tpu_custom_call.1} parent=58 // loop_footer_branch
                  %213 = sbr.rel target = $region61
                $region66: #{tpu_custom_call.1} parent=58 // loop_exit
                  _
              $region59: #{tpu_custom_call.1} parent=43 // pred_fallthru
                _
              // Predicated region
              $region67: #{tpu_custom_call.1} parent=43 // pred_check
                _
              $region68: #{tpu_custom_call.1} parent=43 // pred_check_branch
                %226 = sbr.rel target = $region70
              $region69: #{tpu_custom_call.1} parent=43 // pred_region
                _
              $region70: #{tpu_custom_call.1} parent=43 // pred_fallthru
                _
            $region44: #{tpu_custom_call.1} parent=39 // pred_fallthru
              _
            // Predicated region
            $region45: #{tpu_custom_call.1} parent=39 // pred_check
              _
            $region46: #{tpu_custom_call.1} parent=39 // pred_check_branch
              %197 = sbr.rel target = $region48
            $region47: #{tpu_custom_call.1} parent=39 // pred_region
              loop: start=0, step=1, limit=1
              $region49: #{tpu_custom_call.1} parent=47 // loop_pre_header
                _
              $region50: #{tpu_custom_call.1} parent=47 // loop_header
                %s200 = sphi 0, %s204
                %p201 = scmp.ge.s32.totalorder %s200, 1
                %s205 = sphi %s191, %s191
                %s206 = sphi %s189, %s189
              $region51: #{tpu_custom_call.1} parent=47 // loop_header_branch
                %203 = sbr.rel (%p201) target = $region55
              $region52: #{tpu_custom_call.1} parent=47 // loop_body
                %v207 = vld [vmem:[%s205] sm:$0xff]
                %208 = vst [vmem:[%s206] sm:$0xff] %v207
                %v209 = vld [vmem:[%s205 + $0x10] sm:$0xff]
                %210 = vst [vmem:[%s206 + $0x8] sm:$0xff] %v209
              $region53: #{tpu_custom_call.1} parent=47 // loop_footer
                %s204 = sadd.s32 1, %s200
              $region54: #{tpu_custom_call.1} parent=47 // loop_footer_branch
                %199 = sbr.rel target = $region50
              $region55: #{tpu_custom_call.1} parent=47 // loop_exit
                _
            $region48: #{tpu_custom_call.1} parent=39 // pred_fallthru
              _
          $region40: #{tpu_custom_call.1} parent=35 // pred_fallthru
            _
          %227 = vnop
        $region36: #{tpu_custom_call.1} parent=31 // pred_fallthru
          _
      $region32: #{tpu_custom_call.1} parent=5 // pred_fallthru
        _
      %p228 = scmp.le.s32.totalorder 1, %s16
      %p229 = scmp.lt.s32.totalorder %s16, 3
      %p230 = pnand %p228, %p229
      %p231 = pneg %p230
      // Predicated region
      $region71: #{tpu_custom_call.1} parent=5 // pred_check
        _
      $region72: #{tpu_custom_call.1} parent=5 // pred_check_branch
        %233 = sbr.rel (%p230) target = $region74
      $region73: #{tpu_custom_call.1} parent=5 // pred_region
        %s234 = ssub.s32 %s16, 1
        %s235 = sand.u32 %s29, 1
        %s236 = sand.u32 %s29, 1
        %s237 = smul.addr %s236, 16
        %s238 = scalar_lea.vmem [#allocation3], %s237
        // Predicated region
        $region75: #{tpu_custom_call.1} parent=73 // pred_check
          %p239 = pneg %p42
        $region76: #{tpu_custom_call.1} parent=73 // pred_check_branch
          %241 = sbr.rel (%p239) target = $region78
        $region77: #{tpu_custom_call.1} parent=73 // pred_region
          _
        $region78: #{tpu_custom_call.1} parent=73 // pred_fallthru
          _
        %s242 = sand.u32 %s29, 1
        %s243 = sand.u32 %s29, 1
        %s244 = smul.addr %s243, 16
        %s245 = scalar_lea.vmem [#allocation3], %s244
        %p246 = pneg %p42
        %p247 = pneg %p39
        %p248 = pneg %p63
        %p249 = pneg %p60
        %p250 = pneg %p84
        %p251 = pneg %p81
        %p252 = pneg %p105
        %p253 = pneg %p102
        %p254 = pneg %p126
        %p255 = pneg %p123
        %p256 = pneg %p152
        %p257 = pneg %p149
        %s258 = sand.u32 %s139, 1
        %s259 = scalar_lea.sflag [#allocation5], %s258
        %s260 = sand.u32 %s139, 1
        %s261 = scalar_lea.vmem [#allocation4], %s260
        %v262 = vld [vmem:[%s1] sm:$0xff]
        %v263 = vld [vmem:[%s1 + $0x8] sm:$0xff]
        %v264 = vld [vmem:[%s1 + $0x10] sm:$0xff]
        %v265 = vld [vmem:[%s1 + $0x18] sm:$0xff]
        %v266 = vld [vmem:[%s1 + $0x20] sm:$0xff]
        %v267 = vld [vmem:[%s1 + $0x28] sm:$0xff]
        %v268 = vld [vmem:[%s1 + $0x30] sm:$0xff]
        %v269 = vld [vmem:[%s1 + $0x38] sm:$0xff]
        %v270 = vld [vmem:[%s238] sm:$0xff]
        %v271 = vld [vmem:[%s238 + $0x8] sm:$0x3]
        %v272 = vld [vmem:[%s2] sm:$0xff]
        %v273 = vld [vmem:[%s2 + $0x8] sm:$0xff]
        %v274 = vld [vmem:[%s2 + $0x10] sm:$0xff]
        %v275 = vld [vmem:[%s2 + $0x18] sm:$0xff]
        %v276 = vld [vmem:[%s2 + $0x20] sm:$0xff]
        %v277 = vld [vmem:[%s2 + $0x28] sm:$0xff]
        %v278 = vld [vmem:[%s2 + $0x30] sm:$0xff]
        %v279 = vld [vmem:[%s2 + $0x38] sm:$0xff]
        %281 = vset.pattern.permute.xlu0 0
        %282 = vperm.xlu0 %281, %v272
        %v283 = vpop.permute.xlu0 %282
        %286 = vset.pattern.permute.xlu0 0
        %287 = vperm.xlu0 %286, %v273
        %v288 = vpop.permute.xlu0 %287
        %291 = vset.pattern.permute.xlu0 0
        %292 = vperm.xlu0 %291, %v274
        %v293 = vpop.permute.xlu0 %292
        %296 = vset.pattern.permute.xlu0 0
        %297 = vperm.xlu0 %296, %v275
        %v298 = vpop.permute.xlu0 %297
        %301 = vset.pattern.permute.xlu0 0
        %302 = vperm.xlu0 %301, %v276
        %v303 = vpop.permute.xlu0 %302
        %306 = vset.pattern.permute.xlu0 0
        %307 = vperm.xlu0 %306, %v277
        %v308 = vpop.permute.xlu0 %307
        %311 = vset.pattern.permute.xlu0 0
        %312 = vperm.xlu0 %311, %v278
        %v313 = vpop.permute.xlu0 %312
        %316 = vset.pattern.permute.xlu0 0
        %317 = vperm.xlu0 %316, %v279
        %v318 = vpop.permute.xlu0 %317
        %vm320 = vcmask 80896
        %v322 = vsel %vm320, %v262, 0
        %v325 = vsel %vm320, %v263, 0
        %v328 = vsel %vm320, %v264, 0
        %v331 = vsel %vm320, %v265, 0
        %v334 = vsel %vm320, %v266, 0
        %v337 = vsel %vm320, %v267, 0
        %v340 = vsel %vm320, %v268, 0
        %v343 = vsel %vm320, %v269, 0
        %vm345 = vcmask 1041408
        %v347 = vsel %vm345, %v271, 0
        %349 = vmatprep.subr.mxu0 0.0
        %350 = vmatpush1.msra.mxu0 %v270
        %351 = vmatprep.subr.mxu0 0.0
        %352 = vmatpush1.msra.mxu0 %v347
        %353 = vmatprep.subr.mxu0 0.0
        %354 = vmatpush1.msra.mxu0 0.0
        %355 = vmatprep.subr.mxu0 0.0
        %356 = vmatpush1.msra.mxu0 0.0
        %357 = vmatprep.subr.mxu0 0.0
        %358 = vmatpush1.msra.mxu0 0.0
        %359 = vmatprep.subr.mxu0 0.0
        %360 = vmatpush1.msra.mxu0 0.0
        %361 = vmatprep.subr.mxu0 0.0
        %362 = vmatpush1.msra.mxu0 0.0
        %363 = vmatprep.subr.mxu0 0.0
        %364 = vmatpush1.msra.mxu0 0.0
        %365 = vmatprep.subr.mxu0 0.0
        %366 = vmatpush1.msra.mxu0 0.0
        %367 = vmatprep.subr.mxu0 0.0
        %368 = vmatpush1.msra.mxu0 0.0
        %369 = vmatprep.subr.mxu0 0.0
        %370 = vmatpush1.msra.mxu0 0.0
        %371 = vmatprep.subr.mxu0 0.0
        %372 = vmatpush1.msra.mxu0 0.0
        %373 = vmatprep.subr.mxu0 0.0
        %374 = vmatpush1.msra.mxu0 0.0
        %375 = vmatprep.subr.mxu0 0.0
        %376 = vmatpush1.msra.mxu0 0.0
        %377 = vmatprep.subr.mxu0 0.0
        %378 = vmatpush1.msra.mxu0 0.0
        %379 = vmatprep.subr.mxu0 0.0
        %380 = vmatpush1.msra.mxu0 0.0
        %381 = vmatprep.subr.mxu0 0.0
        %382 = vmatpush1.msra.mxu0 0.0
        %383 = vmatprep.subr.mxu0 0.0
        %384 = vmatpush1.msra.mxu0 0.0
        %385 = vmatprep.subr.mxu0 0.0
        %386 = vmatpush1.msra.mxu0 0.0
        %387 = vmatprep.subr.mxu0 0.0
        %388 = vmatpush1.msra.mxu0 0.0
        %389 = vmatprep.subr.mxu0 0.0
        %390 = vmatpush1.msra.mxu0 0.0
        %391 = vmatprep.subr.mxu0 0.0
        %392 = vmatpush1.msra.mxu0 0.0
        %393 = vmatprep.subr.mxu0 0.0
        %394 = vmatpush1.msra.mxu0 0.0
        %395 = vmatprep.subr.mxu0 0.0
        %396 = vmatpush1.msra.mxu0 0.0
        %397 = vmatprep.subr.mxu0 0.0
        %398 = vmatpush1.msra.mxu0 0.0
        %399 = vmatprep.subr.mxu0 0.0
        %400 = vmatpush1.msra.mxu0 0.0
        %401 = vmatprep.subr.mxu0 0.0
        %402 = vmatpush1.msra.mxu0 0.0
        %403 = vmatprep.subr.mxu0 0.0
        %404 = vmatpush1.msra.mxu0 0.0
        %405 = vmatprep.subr.mxu0 0.0
        %406 = vmatpush1.msra.mxu0 0.0
        %407 = vmatprep.subr.mxu0 0.0
        %408 = vmatpush1.msra.mxu0 0.0
        %409 = vmatprep.subr.mxu0 0.0
        %410 = vmatpush1.msra.mxu0 0.0
        %411 = vmatprep.subr.mxu0 0.0
        %412 = vmatpush1.msra.mxu0 0.0
        %413 = vmatprep.mubr.f32.mxu0 0.0
        %414 = vmatmul.mubr.f32.gmra.mrb[0].mxu0 %v322
        %v415 = vpop.f32.mrb[0].mxu0
        %v416 = vadd.f32 %v283, %v415
        %v417 = vpop.f32.mrb[0].mxu0
        %418 = vmatprep.mubr.f32.mxu0 0.0
        %419 = vmatmul.mubr.f32.gmra.mrb[0].mxu0 %v325
        %v420 = vpop.f32.mrb[0].mxu0
        %v421 = vadd.f32 %v288, %v420
        %v422 = vpop.f32.mrb[0].mxu0
        %423 = vmatprep.mubr.f32.mxu0 0.0
        %424 = vmatmul.mubr.f32.gmra.mrb[0].mxu0 %v328
        %v425 = vpop.f32.mrb[0].mxu0
        %v426 = vadd.f32 %v293, %v425
        %v427 = vpop.f32.mrb[0].mxu0
        %428 = vmatprep.mubr.f32.mxu0 0.0
        %429 = vmatmul.mubr.f32.gmra.mrb[0].mxu0 %v331
        %v430 = vpop.f32.mrb[0].mxu0
        %v431 = vadd.f32 %v298, %v430
        %v432 = vpop.f32.mrb[0].mxu0
        %433 = vmatprep.mubr.f32.mxu0 0.0
        %434 = vmatmul.mubr.f32.gmra.mrb[0].mxu0 %v334
        %v435 = vpop.f32.mrb[0].mxu0
        %v436 = vadd.f32 %v303, %v435
        %v437 = vpop.f32.mrb[0].mxu0
        %438 = vmatprep.mubr.f32.mxu0 0.0
        %439 = vmatmul.mubr.f32.gmra.mrb[0].mxu0 %v337
        %v440 = vpop.f32.mrb[0].mxu0
        %v441 = vadd.f32 %v308, %v440
        %v442 = vpop.f32.mrb[0].mxu0
        %443 = vmatprep.mubr.f32.mxu0 0.0
        %444 = vmatmul.mubr.f32.gmra.mrb[0].mxu0 %v340
        %v445 = vpop.f32.mrb[0].mxu0
        %v446 = vadd.f32 %v313, %v445
        %v447 = vpop.f32.mrb[0].mxu0
        %448 = vmatprep.mubr.f32.mxu0 0.0
        %449 = vmatmul.mubr.f32.gmra.mrb[0].mxu0 %v343
        %v450 = vpop.f32.mrb[0].mxu0
        %v451 = vadd.f32 %v318, %v450
        %v452 = vpop.f32.mrb[0].mxu0
        %453 = vdwg.mxu0
        %v454 = vmax.f32 %v416, 0.0
        %v455 = vmax.f32 %v421, 0.0
        %v456 = vmax.f32 %v426, 0.0
        %v457 = vmax.f32 %v431, 0.0
        %v458 = vmax.f32 %v436, 0.0
        %v459 = vmax.f32 %v441, 0.0
        %v460 = vmax.f32 %v446, 0.0
        %v461 = vmax.f32 %v451, 0.0
        %v462 = vld [vmem:[%s3] sm:$0x1]
        %v463 = vld [vmem:[#allocation2] sm:$0x1]
        %465 = vset.pattern.permute.xlu0 0
        %466 = vperm.xlu0 %465, %v463
        %v467 = vpop.permute.xlu0 %466
        %v469 = vlaneseq
        %v470 = vshrl.u32 %v469, 7
        %v471 = vsub.s32 0, %v470
        %v472 = vrot.slane %v467, %v471
        %vm473 = vcmask 523264
        %v475 = vsel %vm473, %v462, 0
        %477 = vmatprep.subr.mxu0 0.0
        %478 = vmatpush1.msra.mxu0 %v454
        %479 = vmatprep.subr.mxu0 0.0
        %480 = vmatpush1.msra.mxu0 %v455
        %481 = vmatprep.subr.mxu0 0.0
        %482 = vmatpush1.msra.mxu0 %v456
        %483 = vmatprep.subr.mxu0 0.0
        %484 = vmatpush1.msra.mxu0 %v457
        %485 = vmatprep.subr.mxu0 0.0
        %486 = vmatpush1.msra.mxu0 %v458
        %487 = vmatprep.subr.mxu0 0.0
        %488 = vmatpush1.msra.mxu0 %v459
        %489 = vmatprep.subr.mxu0 0.0
        %490 = vmatpush1.msra.mxu0 %v460
        %491 = vmatprep.subr.mxu0 0.0
        %492 = vmatpush1.msra.mxu0 %v461
        %493 = vmatprep.subr.mxu0 0.0
        %494 = vmatpush1.msra.mxu0 0.0
        %495 = vmatprep.subr.mxu0 0.0
        %496 = vmatpush1.msra.mxu0 0.0
        %497 = vmatprep.subr.mxu0 0.0
        %498 = vmatpush1.msra.mxu0 0.0
        %499 = vmatprep.subr.mxu0 0.0
        %500 = vmatpush1.msra.mxu0 0.0
        %501 = vmatprep.subr.mxu0 0.0
        %502 = vmatpush1.msra.mxu0 0.0
        %503 = vmatprep.subr.mxu0 0.0
        %504 = vmatpush1.msra.mxu0 0.0
        %505 = vmatprep.subr.mxu0 0.0
        %506 = vmatpush1.msra.mxu0 0.0
        %507 = vmatprep.subr.mxu0 0.0
        %508 = vmatpush1.msra.mxu0 0.0
        %509 = vmatprep.subr.mxu0 0.0
        %510 = vmatpush1.msra.mxu0 0.0
        %511 = vmatprep.subr.mxu0 0.0
        %512 = vmatpush1.msra.mxu0 0.0
        %513 = vmatprep.subr.mxu0 0.0
        %514 = vmatpush1.msra.mxu0 0.0
        %515 = vmatprep.subr.mxu0 0.0
        %516 = vmatpush1.msra.mxu0 0.0
        %517 = vmatprep.subr.mxu0 0.0
        %518 = vmatpush1.msra.mxu0 0.0
        %519 = vmatprep.subr.mxu0 0.0
        %520 = vmatpush1.msra.mxu0 0.0
        %521 = vmatprep.subr.mxu0 0.0
        %522 = vmatpush1.msra.mxu0 0.0
        %523 = vmatprep.subr.mxu0 0.0
        %524 = vmatpush1.msra.mxu0 0.0
        %525 = vmatprep.subr.mxu0 0.0
        %526 = vmatpush1.msra.mxu0 0.0
        %527 = vmatprep.subr.mxu0 0.0
        %528 = vmatpush1.msra.mxu0 0.0
        %529 = vmatprep.subr.mxu0 0.0
        %530 = vmatpush1.msra.mxu0 0.0
        %531 = vmatprep.subr.mxu0 0.0
        %532 = vmatpush1.msra.mxu0 0.0
        %533 = vmatprep.subr.mxu0 0.0
        %534 = vmatpush1.msra.mxu0 0.0
        %535 = vmatprep.subr.mxu0 0.0
        %536 = vmatpush1.msra.mxu0 0.0
        %537 = vmatprep.subr.mxu0 0.0
        %538 = vmatpush1.msra.mxu0 0.0
        %539 = vmatprep.subr.mxu0 0.0
        %540 = vmatpush1.msra.mxu0 0.0
        %541 = vmatprep.mubr.f32.mxu0 0.0
        %542 = vmatmul.mubr.f32.gmra.mrb[0].mxu0 %v475
        %v543 = vpop.f32.mrb[0].mxu0
        %v544 = vadd.f32 %v472, %v543
        %v545 = vpop.f32.mrb[0].mxu0
        %546 = vdwg.mxu0
        %547 = vst [vmem:[%s261] sm:$0x1] %v544
        %s548 = sand.u32 %s139, 1
        %s549 = scalar_lea.sflag [#allocation5], %s548
        %s550 = sand.u32 %s139, 1
        %s551 = scalar_lea.vmem [#allocation4], %s550
        // Predicated region
        $region79: #{tpu_custom_call.1} parent=73 // pred_check
          %p552 = pneg %p149
        $region80: #{tpu_custom_call.1} parent=73 // pred_check_branch
          %554 = sbr.rel (%p552) target = $region82
        $region81: #{tpu_custom_call.1} parent=73 // pred_region
          %s556 = ssub.s32 16, 16
          %557 = vsyncadd %s549, %s556
          %s558 = smul.addr %s21, 16
          %s559 = scalar_lea.hbm %s5, %s558
          %s561 = sshll.u32 %s551, 4
          %s562 = int_to_ptr.vmem [resolvable:$true] %s561
          %564 = dma.vmem_to_hbm [thread:$0]  %s562, 16, %s559, %s549
        $region82: #{tpu_custom_call.1} parent=73 // pred_fallthru
          _
      $region74: #{tpu_custom_call.1} parent=5 // pred_fallthru
        _
      %p565 = scmp.le.s32.totalorder 2, %s16
      // Predicated region
      $region83: #{tpu_custom_call.1} parent=5 // pred_check
        %p566 = pneg %p565
      $region84: #{tpu_custom_call.1} parent=5 // pred_check_branch
        %568 = sbr.rel (%p566) target = $region86
      $region85: #{tpu_custom_call.1} parent=5 // pred_region
        %s569 = ssub.s32 %s16, 2
        // Predicated region
        $region87: #{tpu_custom_call.1} parent=85 // pred_check
          %p570 = pneg %p155
        $region88: #{tpu_custom_call.1} parent=85 // pred_check_branch
          %572 = sbr.rel (%p570) target = $region90
        $region89: #{tpu_custom_call.1} parent=85 // pred_region
          %s573 = sand.u32 %s140, 1
          %s574 = scalar_lea.sflag [#allocation5], %s573
          %s575 = sand.u32 %s140, 1
          %s576 = scalar_lea.vmem [#allocation4], %s575
          %577 = dma.done %s574, 16
        $region90: #{tpu_custom_call.1} parent=85 // pred_fallthru
          _
      $region86: #{tpu_custom_call.1} parent=5 // pred_fallthru
        _
    $region6: #{tpu_custom_call.1} parent=1 // loop_footer
      %s20 = sadd.s32 1, %s16
    $region7: #{tpu_custom_call.1} parent=1 // loop_footer_branch
      %15 = sbr.rel target = $region3
    $region8: #{tpu_custom_call.1} parent=1 // loop_exit
      _
    %578 = vsyncpa [#allocation5], 1
    %s579 = scalar_lea.sflag [#allocation5], 1
    %580 = vsyncpa %s579, 1

</llo_original>
